<compile_context>
chip_gen: v7x
topology: tpu7x:2x2x1
jax: 0.10.0
libtpu: 0.0.40
codegen_flags: <defaults>
</compile_context>

<pallas_src>
import functools

import jax
import jax.numpy as jnp
from jax.experimental import pallas as pl
from jax.experimental.pallas import tpu as pltpu


def _round_up(x, m):
    return ((x + m - 1) // m) * m


# ----------------------------------------------------------------------------
# Pallas kernel: tiled  X @ W  (+ shift) (+ residual) (-> ReLU)
#   X: (M, K)  im2col patches (BN scale pre-folded into W)
#   W: (K, Cout)
#   shift: (1, Cout)  folded BN shift (sum of shifts when shortcut is fused)
# ----------------------------------------------------------------------------
def _fused_matmul_kernel(do_relu, has_res, *refs):
    if has_res:
        x_ref, w_ref, shift_ref, res_ref, o_ref, acc_ref = refs
    else:
        x_ref, w_ref, shift_ref, o_ref, acc_ref = refs
        res_ref = None

    k = pl.program_id(2)

    @pl.when(k == 0)
    def _init():
        acc_ref[...] = jnp.zeros_like(acc_ref)

    acc_ref[...] += jnp.dot(x_ref[...], w_ref[...],
                            preferred_element_type=jnp.float32)

    @pl.when(k == pl.num_programs(2) - 1)
    def _finalize():
        out = acc_ref[...] + shift_ref[...]
        if has_res:
            out = out + res_ref[...]
        if do_relu:
            out = jnp.maximum(out, 0.0)
        o_ref[...] = out.astype(o_ref.dtype)


def matmul_bn_act(x_mat, w_mat, shift, residual=None, relu=False,
                  compute_dtype=jnp.bfloat16,
                  tm_target=256, tn=128, tk_target=512):
    """Fused (X @ W) + shift (+ residual) (+ ReLU) with M/N/K tiling.

    x_mat: (M, K) f32, w_mat: (K, Cout) f32 (BN scale already folded in),
    shift: (Cout,) or (1, Cout) f32, residual: optional (M, Cout) f32.
    Returns (M, Cout) f32.
    """
    M, K = x_mat.shape
    K2, cout = w_mat.shape
    assert K == K2

    # Tile sizes:
    #  - tn = 128 lanes (lane-dense output, full MXU columns after padding).
    #  - tm multiple of 8 sublanes, tk multiple of 128.
    # Sized well under v7x's 64 MiB VMEM / 32 MiB scoped limit even with
    # double-buffering (<~3 MiB of live blocks per buffer set).
    tm = min(tm_target, _round_up(M, 8))
    tk = min(tk_target, _round_up(K, 128))
    m_pad = _round_up(M, tm)
    k_pad = _round_up(K, tk)
    cout_pad = _round_up(cout, tn)

    # Zero padding keeps the math exact and padded lanes finite (relu(0+0)=0).
    x_p = jnp.pad(x_mat, ((0, m_pad - M), (0, k_pad - K))).astype(compute_dtype)
    w_p = jnp.pad(w_mat, ((0, k_pad - K), (0, cout_pad - cout))).astype(compute_dtype)
    shift_p = jnp.pad(jnp.reshape(shift, (1, -1)).astype(jnp.float32),
                      ((0, 0), (0, cout_pad - cout)))

    has_res = residual is not None
    inputs = [x_p, w_p, shift_p]
    in_specs = [
        pl.BlockSpec((tm, tk), lambda i, j, k: (i, k)),
        pl.BlockSpec((tk, tn), lambda i, j, k: (k, j)),
        pl.BlockSpec((1, tn), lambda i, j, k: (0, j)),
    ]
    if has_res:
        r_p = jnp.pad(residual.astype(jnp.float32),
                      ((0, m_pad - M), (0, cout_pad - cout)))
        inputs.append(r_p)
        in_specs.append(pl.BlockSpec((tm, tn), lambda i, j, k: (i, j)))

    grid = (m_pad // tm, cout_pad // tn, k_pad // tk)

    bytes_accessed = (
        x_p.size * x_p.dtype.itemsize
        + w_p.size * w_p.dtype.itemsize
        + shift_p.size * 4
        + (r_p.size * 4 if has_res else 0)
        + m_pad * cout_pad * 4)

    kernel = functools.partial(_fused_matmul_kernel, relu, has_res)

    out = pl.pallas_call(
        kernel,
        out_shape=jax.ShapeDtypeStruct((m_pad, cout_pad), jnp.float32),
        grid_spec=pltpu.PrefetchScalarGridSpec(
            num_scalar_prefetch=0,
            grid=grid,
            in_specs=in_specs,
            out_specs=pl.BlockSpec((tm, tn), lambda i, j, k: (i, j)),
            scratch_shapes=[pltpu.VMEM((tm, tn), jnp.float32)],
        ),
        compiler_params=pltpu.CompilerParams(
            dimension_semantics=("parallel", "parallel", "arbitrary"),
            vmem_limit_bytes=32 * 1024 * 1024,
        ),
        cost_estimate=pl.CostEstimate(
            flops=2 * m_pad * k_pad * cout_pad,
            transcendentals=0,
            bytes_accessed=bytes_accessed,
        ),
    )(*inputs)

    return out[:M, :cout]


# ----------------------------------------------------------------------------
# Plain-JAX glue: im2col, weight packing, eval-mode BN folding
# ----------------------------------------------------------------------------
def im2col_3x3(x_nhwc, stride):
    """3x3, padding=1 patches.  Returns ((N*Ho*Wo, 9*C), Ho, Wo)."""
    n, h, w, c = x_nhwc.shape
    ho = (h + 2 - 3) // stride + 1
    wo = (w + 2 - 3) // stride + 1
    xp = jnp.pad(x_nhwc, ((0, 0), (1, 1), (1, 1), (0, 0)))
    cols = []
    for kh in range(3):
        for kw in range(3):
            cols.append(
                xp[:,
                   kh:kh + stride * (ho - 1) + 1:stride,
                   kw:kw + stride * (wo - 1) + 1:stride, :])
    patches = jnp.concatenate(cols, axis=-1)       # (N,Ho,Wo,9C), order (kh,kw,cin)
    return patches.reshape(n * ho * wo, 9 * c), ho, wo


def pack_weight_oihw(w_oihw):
    """(Cout, Cin, Kh, Kw) -> (Kh*Kw*Cin, Cout), matching im2col ordering."""
    cout, cin, kh, kw = w_oihw.shape
    return jnp.transpose(w_oihw, (2, 3, 1, 0)).reshape(kh * kw * cin, cout)


def fold_bn(gamma, beta, running_mean, running_var, eps=1e-5):
    scale = gamma / jnp.sqrt(running_var + eps)
    shift = beta - running_mean * scale
    return scale.reshape(1, -1), shift.reshape(1, -1)


# ----------------------------------------------------------------------------
# BasicBlock forward (NCHW in / NCHW out, like PyTorch)
# ----------------------------------------------------------------------------
def basic_block_forward(x_nchw, params, stride, compute_dtype=jnp.bfloat16):
    in_planes = x_nchw.shape[1]
    planes = params["w1"].shape[0]

    x = jnp.transpose(x_nchw, (0, 2, 3, 1)).astype(jnp.float32)   # NHWC
    n, h, w, _ = x.shape

    # ---- conv1 (3x3, stride) + bn1 + relu : BN scale folded into weights ----
    p1, ho, wo = im2col_3x3(x, stride)
    s1, b1 = fold_bn(params["g1"], params["be1"], params["m1"], params["v1"])
    w1_eff = pack_weight_oihw(params["w1"]) * s1          # f32 pre-scale
    out1 = matmul_bn_act(p1, w1_eff, b1, relu=True, compute_dtype=compute_dtype)
    out1_img = out1.reshape(n, ho, wo, planes)

    # ---- conv2 (3x3, s=1) + bn2 (+ shortcut) + add + relu : one kernel ----
    p2, _, _ = im2col_3x3(out1_img, 1)
    s2, b2 = fold_bn(params["g2"], params["be2"], params["m2"], params["v2"])
    w2_eff = pack_weight_oihw(params["w2"]) * s2

    if stride != 1 or in_planes != planes:
        # 1x1 projection shortcut (conv+BN) fused into conv2's K dimension.
        xs = x[:, 0:stride * (ho - 1) + 1:stride,
                  0:stride * (wo - 1) + 1:stride, :]
        xs_mat = xs.reshape(n * ho * wo, in_planes)
        ss, bs = fold_bn(params["gs"], params["bes"], params["ms"], params["vs"])
        ws_eff = pack_weight_oihw(params["ws"]) * ss
        x_big = jnp.concatenate([p2, xs_mat], axis=1)      # (M, 9*planes+Cin)
        w_big = jnp.concatenate([w2_eff, ws_eff], axis=0)  # (9*planes+Cin, planes)
        out = matmul_bn_act(x_big, w_big, b2 + bs, relu=True,
                            compute_dtype=compute_dtype)
    else:
        # Identity shortcut: residual added on the f32 accumulator in-kernel.
        residual = x.reshape(n * h * w, in_planes)
        out = matmul_bn_act(p2, w2_eff, b2, residual=residual, relu=True,
                            compute_dtype=compute_dtype)

    out = out.reshape(n, ho, wo, planes)
    return jnp.transpose(out, (0, 3, 1, 2))                # back to NCHW


# ----------------------------------------------------------------------------
# Pure-JAX reference (lax.conv) for correctness checking
# ----------------------------------------------------------------------------
def reference_forward(x_nchw, params, stride):
    def conv(x, w, s, pad):
        return jax.lax.conv_general_dilated(
            x, w, (s, s), padding=[(pad, pad), (pad, pad)],
            dimension_numbers=("NCHW", "OIHW", "NCHW"))

    def bn(x, g, be, m, v, eps=1e-5):
        sc = (g / jnp.sqrt(v + eps)).reshape(1, -1, 1, 1)
        sh = (be - m * g / jnp.sqrt(v + eps)).reshape(1, -1, 1, 1)
        return x * sc + sh

    out = jax.nn.relu(bn(conv(x_nchw, params["w1"], stride, 1),
                         params["g1"], params["be1"], params["m1"], params["v1"]))
    out = bn(conv(out, params["w2"], 1, 1),
             params["g2"], params["be2"], params["m2"], params["v2"])
    in_planes, planes = x_nchw.shape[1], params["w1"].shape[0]
    if stride != 1 or in_planes != planes:
        sc = bn(conv(x_nchw, params["ws"], stride, 0),
                params["gs"], params["bes"], params["ms"], params["vs"])
    else:
        sc = x_nchw
    return jax.nn.relu(out + sc)


# ----------------------------------------------------------------------------
# Deterministic parameter construction (shapes from BasicBlock.__init__)
# ----------------------------------------------------------------------------
def make_params(key, in_planes, planes, stride):
    keys = jax.random.split(key, 16)
    p = {
        "w1": 0.1 * jax.random.normal(keys[0], (planes, in_planes, 3, 3), jnp.float32),
        "g1": 1.0 + 0.1 * jax.random.normal(keys[1], (planes,), jnp.float32),
        "be1": 0.1 * jax.random.normal(keys[2], (planes,), jnp.float32),
        "m1": 0.1 * jax.random.normal(keys[3], (planes,), jnp.float32),
        "v1": 1.0 + 0.1 * jax.random.uniform(keys[4], (planes,), jnp.float32),
        "w2": 0.1 * jax.random.normal(keys[5], (planes, planes, 3, 3), jnp.float32),
        "g2": 1.0 + 0.1 * jax.random.normal(keys[6], (planes,), jnp.float32),
        "be2": 0.1 * jax.random.normal(keys[7], (planes,), jnp.float32),
        "m2": 0.1 * jax.random.normal(keys[8], (planes,), jnp.float32),
        "v2": 1.0 + 0.1 * jax.random.uniform(keys[9], (planes,), jnp.float32),
    }
    if stride != 1 or in_planes != planes:
        p.update({
            "ws": 0.1 * jax.random.normal(keys[10], (planes, in_planes, 1, 1), jnp.float32),
            "gs": 1.0 + 0.1 * jax.random.normal(keys[11], (planes,), jnp.float32),
            "bes": 0.1 * jax.random.normal(keys[12], (planes,), jnp.float32),
            "ms": 0.1 * jax.random.normal(keys[13], (planes,), jnp.float32),
            "vs": 1.0 + 0.1 * jax.random.uniform(keys[14], (planes,), jnp.float32),
        })
    return p


if __name__ == "__main__":
    key = jax.random.PRNGKey(0)

    # Config A exercises the fused 1x1 projection-shortcut path (stride=2),
    # Config B exercises the in-kernel identity-residual path (stride=1).
    configs = [
        (2, 4, 8, 16, 16, 2),   # N, in_planes, planes, H, W, stride
        (2, 8, 8, 16, 16, 1),
    ]

    for idx, (N, cin, cout, H, W, stride) in enumerate(configs):
        k_x, k_p = jax.random.split(jax.random.fold_in(key, idx))
        x = jax.random.normal(k_x, (N, cin, H, W), jnp.float32)
        params = make_params(k_p, cin, cout, stride)

        ref = jax.block_until_ready(reference_forward(x, params, stride))
        ho, wo = (H + 2 - 3) // stride + 1, (W + 2 - 3) // stride + 1
        assert ref.shape == (N, cout, ho, wo), ref.shape

        # Exact-math check: f32 MXU operands vs lax.conv reference.
        out_f32 = jax.block_until_ready(
            basic_block_forward(x, params, stride, compute_dtype=jnp.float32))
        assert out_f32.shape == ref.shape, out_f32.shape
        err_f32 = float(jnp.max(jnp.abs(out_f32 - ref)))
        assert err_f32 < 1e-4, f"f32 path, config {idx}: max err {err_f32}"

        # Production path: bf16 operands, f32 accumulate (looser tolerance).
        out_bf16 = jax.block_until_ready(
            basic_block_forward(x, params, stride, compute_dtype=jnp.bfloat16))
        err_bf16 = float(jnp.max(jnp.abs(out_bf16 - ref)))
        assert err_bf16 < 1e-1, f"bf16 path, config {idx}: max err {err_bf16}"

    print("KERNEL_OK")
</pallas_src>

<mosaic_0001>
module attributes {stable_mosaic.version = 11 : i64} {
  func.func @_fused_matmul_kernel(%arg0: i32, %arg1: i32, %arg2: i32, %arg3: memref<128x128xf32, #tpu.memory_space<vmem>>, %arg4: memref<128x128xf32, #tpu.memory_space<vmem>>, %arg5: memref<1x128xf32, #tpu.memory_space<vmem>>, %arg6: memref<128x128xf32, #tpu.memory_space<vmem>>, %arg7: memref<128x128xf32, #tpu.memory_space<vmem>>) attributes {dimension_semantics = [#tpu.dimension_semantics<parallel>, #tpu.dimension_semantics<parallel>, #tpu.dimension_semantics<arbitrary>], iteration_bounds = array<i64: 1, 1, 1>, scalar_prefetch = 0 : i64, scratch_operands = 1 : i64, tpu.core_type = #tpu.core_type<tc>, window_params = [{transform_indices = @transform_0, window_bounds = array<i64: 128, 128>}, {transform_indices = @transform_1, window_bounds = array<i64: 128, 128>}, {transform_indices = @transform_2, window_bounds = array<i64: 1, 128>}, {transform_indices = @transform_3, window_bounds = array<i64: 128, 128>}]} {
    %c0_i32 = arith.constant 0 : i32
    %0 = arith.cmpi eq, %arg2, %c0_i32 : i32
    %1 = arith.extui %0 : i1 to i32
    %c0_i32_0 = arith.constant 0 : i32
    %2 = arith.cmpi ne, %1, %c0_i32_0 : i32
    scf.if %2 {
      %cst_10 = arith.constant 0.000000e+00 : f32
      %12 = vector.broadcast %cst_10 : f32 to vector<128x128xf32>
      %c0_11 = arith.constant 0 : index
      %c0_12 = arith.constant 0 : index
      %13 = vector.load %arg7[%c0_11, %c0_12] : memref<128x128xf32, #tpu.memory_space<vmem>>, vector<128x128xf32>
      tpu.vector_store %arg7[%c0_11, %c0_12], %12 {strides = array<i32>} : memref<128x128xf32, #tpu.memory_space<vmem>>, vector<128x128xf32>,
    } else {
    }
    %c0 = arith.constant 0 : index
    %c0_1 = arith.constant 0 : index
    %3 = vector.load %arg7[%c0, %c0_1] : memref<128x128xf32, #tpu.memory_space<vmem>>, vector<128x128xf32>
    %c0_2 = arith.constant 0 : index
    %c0_3 = arith.constant 0 : index
    %4 = vector.load %arg3[%c0_2, %c0_3] : memref<128x128xf32, #tpu.memory_space<vmem>>, vector<128x128xf32>
    %c0_4 = arith.constant 0 : index
    %c0_5 = arith.constant 0 : index
    %5 = vector.load %arg4[%c0_4, %c0_5] : memref<128x128xf32, #tpu.memory_space<vmem>>, vector<128x128xf32>
    %cst = arith.constant dense<0.000000e+00> : vector<128x128xf32>
    %6 = tpu.matmul %4, %5, %cst {dimension_numbers = #tpu.dot_dimension_numbers<[1], [0], [0], [1], [0, 0, 1, 1], [], []>} : vector<128x128xf32>, vector<128x128xf32>, vector<128x128xf32> -> vector<128x128xf32>
    %7 = arith.addf %3, %6 : vector<128x128xf32>
    %c0_6 = arith.constant 0 : index
    %c0_7 = arith.constant 0 : index
    %8 = vector.load %arg7[%c0_6, %c0_7] : memref<128x128xf32, #tpu.memory_space<vmem>>, vector<128x128xf32>
    tpu.vector_store %arg7[%c0_6, %c0_7], %7 {strides = array<i32>} : memref<128x128xf32, #tpu.memory_space<vmem>>, vector<128x128xf32>,
    %c0_i32_8 = arith.constant 0 : i32
    %9 = arith.cmpi eq, %arg2, %c0_i32_8 : i32
    %10 = arith.extui %9 : i1 to i32
    %c0_i32_9 = arith.constant 0 : i32
    %11 = arith.cmpi ne, %10, %c0_i32_9 : i32
    scf.if %11 {
      %c0_10 = arith.constant 0 : index
      %c0_11 = arith.constant 0 : index
      %12 = vector.load %arg7[%c0_10, %c0_11] : memref<128x128xf32, #tpu.memory_space<vmem>>, vector<128x128xf32>
      %c0_12 = arith.constant 0 : index
      %c0_13 = arith.constant 0 : index
      %13 = vector.load %arg5[%c0_12, %c0_13] : memref<1x128xf32, #tpu.memory_space<vmem>>, vector<1x128xf32>
      %14 = vector.broadcast %13 : vector<1x128xf32> to vector<128x128xf32>
      %15 = arith.addf %12, %14 : vector<128x128xf32>
      %cst_14 = arith.constant 0.000000e+00 : f32
      %16 = vector.broadcast %cst_14 : f32 to vector<128x128xf32>
      %17 = arith.maximumf %15, %16 : vector<128x128xf32>
      %c0_15 = arith.constant 0 : index
      %c0_16 = arith.constant 0 : index
      %18 = vector.load %arg6[%c0_15, %c0_16] : memref<128x128xf32, #tpu.memory_space<vmem>>, vector<128x128xf32>
      tpu.vector_store %arg6[%c0_15, %c0_16], %17 {strides = array<i32>} : memref<128x128xf32, #tpu.memory_space<vmem>>, vector<128x128xf32>,
    } else {
    }
    return
  }
  func.func @transform_0(%arg0: i32, %arg1: i32, %arg2: i32) -> (i32, i32) {
    %c0_i32 = arith.constant 0 : i32
    return %arg0, %arg2 : i32, i32
  }
  func.func @transform_1(%arg0: i32, %arg1: i32, %arg2: i32) -> (i32, i32) {
    %c0_i32 = arith.constant 0 : i32
    return %arg2, %arg1 : i32, i32
  }
  func.func @transform_2(%arg0: i32, %arg1: i32, %arg2: i32) -> (i32, i32) {
    %c0_i32 = arith.constant 0 : i32
    %c0_i32_0 = arith.constant 0 : i32
    return %c0_i32, %arg1 : i32, i32
  }
  func.func @transform_3(%arg0: i32, %arg1: i32, %arg2: i32) -> (i32, i32) {
    %c0_i32 = arith.constant 0 : i32
    return %arg0, %arg1 : i32, i32
  }
}

</mosaic_0001>

<llo_original>
// kernel: tpu_custom_call.1
$region0: #{tpu_custom_call.1}
  #allocation0 [shape = 'u32[]', space=smem, size = 0x4, offset = 0x4, fixed_abs, tag = 'smem constant byte address 0x4 - core index']
  #allocation1 [shape = 'u32[144,128]{1,0:T(1,128)}', space=vmem, size = 0x12000, scoped, tag = 'internal scratch']
  #allocation2 [shape = 'f32[128,128]{1,0:T(8,128)}', space=vmem, size = 0x10000, scoped, tag = 'scratch operand']
  %s0 = inlined_call_operand.hbm [shape: f32[128,128], index: 0, kind: input, shape index: {}]
  %s1 = inlined_call_operand.hbm [shape: f32[128,128], index: 1, kind: input, shape index: {}]
  %s2 = inlined_call_operand.vmem [shape: f32[1,128], index: 2, kind: input, shape index: {}]
  %s3 = inlined_call_operand.hbm [shape: f32[128,128], index: 3, kind: output, shape index: {}]
  %s4 = sld [smem:[#allocation0]]
  $region38: #{tpu_custom_call.1} parent=0
    _
  %s6 = ssub.s32 1, %s4
  %s7 = scalar_select 0, %s6, %s4
  $region1: #{tpu_custom_call.1} parent=0
    #allocation3 [shape = 'u8[65536]{0}', space=vmem, size = 0x10000, scoped, tag = 'input window, operand 0, single buffered']
    #allocation4 [shape = 's32[1]{0}', space=sflag, size = 0x4, scoped, tag = 'scoped memory for tpu_custom_call.1']
    #allocation5 [shape = 's32[1]{0}', space=sflag, size = 0x4, scoped, tag = 'scoped memory for tpu_custom_call.1']
    #allocation6 [shape = 'u8[65536]{0}', space=vmem, size = 0x10000, scoped, tag = 'input window, operand 1, single buffered']
    #allocation7 [shape = 's32[1]{0}', space=sflag, size = 0x4, scoped, tag = 'scoped memory for tpu_custom_call.1']
    #allocation8 [shape = 'u8[65536]{0}', space=vmem, size = 0x10000, scoped, tag = 'output window, operand 0, single buffered']
    %8 = vsyncpa [#allocation4], 0
    %9 = vsyncpa [#allocation7], 0
    %10 = vsyncpa [#allocation5], 0
    // Predicated region
    $region2: #{tpu_custom_call.1} parent=1 // pred_check
      _
    $region3: #{tpu_custom_call.1} parent=1 // pred_check_branch
      %12 = sbr.rel (0) target = $region5
    $region4: #{tpu_custom_call.1} parent=1 // pred_region
      %s14 = ssub.s32 2048, 2048
      %15 = vsyncadd [#allocation4], %s14
      %s16 = sshll.u32 [#allocation3], 4
      %s17 = int_to_ptr.vmem [resolvable:$true] %s16
      %22 = dma.hbm_to_vmem [thread:$0]  %s0, 2048, %s17, [#allocation4], 128, 128, 8
    $region5: #{tpu_custom_call.1} parent=1 // pred_fallthru
      _
    // Predicated region
    $region6: #{tpu_custom_call.1} parent=1 // pred_check
      _
    $region7: #{tpu_custom_call.1} parent=1 // pred_check_branch
      %24 = sbr.rel (0) target = $region9
    $region8: #{tpu_custom_call.1} parent=1 // pred_region
      %s26 = ssub.s32 2048, 2048
      %27 = vsyncadd [#allocation7], %s26
      %s28 = sshll.u32 [#allocation6], 4
      %s29 = int_to_ptr.vmem [resolvable:$true] %s28
      %34 = dma.hbm_to_vmem [thread:$0]  %s1, 2048, %s29, [#allocation7], 128, 128, 8
    $region9: #{tpu_custom_call.1} parent=1 // pred_fallthru
      _
    // Predicated region
    $region10: #{tpu_custom_call.1} parent=1 // pred_check
      _
    $region11: #{tpu_custom_call.1} parent=1 // pred_check_branch
      %36 = sbr.rel (0) target = $region13
    $region12: #{tpu_custom_call.1} parent=1 // pred_region
      _
    $region13: #{tpu_custom_call.1} parent=1 // pred_fallthru
      _
    // Predicated region
    $region14: #{tpu_custom_call.1} parent=1 // pred_check
      _
    $region15: #{tpu_custom_call.1} parent=1 // pred_check_branch
      %38 = sbr.rel (0) target = $region17
    $region16: #{tpu_custom_call.1} parent=1 // pred_region
      %39 = dma.done [#allocation4], 2048
    $region17: #{tpu_custom_call.1} parent=1 // pred_fallthru
      _
    // Predicated region
    $region18: #{tpu_custom_call.1} parent=1 // pred_check
      _
    $region19: #{tpu_custom_call.1} parent=1 // pred_check_branch
      %41 = sbr.rel (0) target = $region21
    $region20: #{tpu_custom_call.1} parent=1 // pred_region
      %42 = dma.done [#allocation7], 2048
    $region21: #{tpu_custom_call.1} parent=1 // pred_fallthru
      _
    %p43 = scmp.eq.s32.totalorder 0, 0
    // Predicated region
    $region22: #{tpu_custom_call.1} parent=1 // pred_check
      %p44 = pneg %p43
    $region23: #{tpu_custom_call.1} parent=1 // pred_check_branch
      %46 = sbr.rel (%p44) target = $region25
    $region24: #{tpu_custom_call.1} parent=1 // pred_region
      %47 = vst [vmem:[#allocation2] sm:$0xff] 0.0
      %48 = vst [vmem:[#allocation2 + $0x8] sm:$0xff] 0.0
      %49 = vst [vmem:[#allocation2 + $0x10] sm:$0xff] 0.0
      %50 = vst [vmem:[#allocation2 + $0x18] sm:$0xff] 0.0
      %51 = vst [vmem:[#allocation2 + $0x20] sm:$0xff] 0.0
      %52 = vst [vmem:[#allocation2 + $0x28] sm:$0xff] 0.0
      %53 = vst [vmem:[#allocation2 + $0x30] sm:$0xff] 0.0
      %54 = vst [vmem:[#allocation2 + $0x38] sm:$0xff] 0.0
      %55 = vst [vmem:[#allocation2 + $0x40] sm:$0xff] 0.0
      %56 = vst [vmem:[#allocation2 + $0x48] sm:$0xff] 0.0
      %57 = vst [vmem:[#allocation2 + $0x50] sm:$0xff] 0.0
      %58 = vst [vmem:[#allocation2 + $0x58] sm:$0xff] 0.0
      %59 = vst [vmem:[#allocation2 + $0x60] sm:$0xff] 0.0
      %60 = vst [vmem:[#allocation2 + $0x68] sm:$0xff] 0.0
      %61 = vst [vmem:[#allocation2 + $0x70] sm:$0xff] 0.0
      %62 = vst [vmem:[#allocation2 + $0x78] sm:$0xff] 0.0
    $region25: #{tpu_custom_call.1} parent=1 // pred_fallthru
      _
    %v63 = vld [vmem:[#allocation2] sm:$0xff]
    %v64 = vld [vmem:[#allocation2 + $0x8] sm:$0xff]
    %v65 = vld [vmem:[#allocation2 + $0x10] sm:$0xff]
    %v66 = vld [vmem:[#allocation2 + $0x18] sm:$0xff]
    %v67 = vld [vmem:[#allocation2 + $0x20] sm:$0xff]
    %v68 = vld [vmem:[#allocation2 + $0x28] sm:$0xff]
    %v69 = vld [vmem:[#allocation2 + $0x30] sm:$0xff]
    %v70 = vld [vmem:[#allocation2 + $0x38] sm:$0xff]
    %v71 = vld [vmem:[#allocation2 + $0x40] sm:$0xff]
    %v72 = vld [vmem:[#allocation2 + $0x48] sm:$0xff]
    %v73 = vld [vmem:[#allocation2 + $0x50] sm:$0xff]
    %v74 = vld [vmem:[#allocation2 + $0x58] sm:$0xff]
    %v75 = vld [vmem:[#allocation2 + $0x60] sm:$0xff]
    %v76 = vld [vmem:[#allocation2 + $0x68] sm:$0xff]
    %v77 = vld [vmem:[#allocation2 + $0x70] sm:$0xff]
    %v78 = vld [vmem:[#allocation2 + $0x78] sm:$0xff]
    %v79 = vld [vmem:[#allocation3] sm:$0xff]
    %v80 = vld [vmem:[#allocation3 + $0x8] sm:$0xff]
    %v81 = vld [vmem:[#allocation3 + $0x10] sm:$0xff]
    %v82 = vld [vmem:[#allocation3 + $0x18] sm:$0xff]
    %v83 = vld [vmem:[#allocation3 + $0x20] sm:$0xff]
    %v84 = vld [vmem:[#allocation3 + $0x28] sm:$0xff]
    %v85 = vld [vmem:[#allocation3 + $0x30] sm:$0xff]
    %v86 = vld [vmem:[#allocation3 + $0x38] sm:$0xff]
    %v87 = vld [vmem:[#allocation3 + $0x40] sm:$0xff]
    %v88 = vld [vmem:[#allocation3 + $0x48] sm:$0xff]
    %v89 = vld [vmem:[#allocation3 + $0x50] sm:$0xff]
    %v90 = vld [vmem:[#allocation3 + $0x58] sm:$0xff]
    %v91 = vld [vmem:[#allocation3 + $0x60] sm:$0xff]
    %v92 = vld [vmem:[#allocation3 + $0x68] sm:$0xff]
    %v93 = vld [vmem:[#allocation3 + $0x70] sm:$0xff]
    %v94 = vld [vmem:[#allocation3 + $0x78] sm:$0xff]
    %v95 = vld [vmem:[#allocation6] sm:$0xff]
    %v96 = vld [vmem:[#allocation6 + $0x8] sm:$0xff]
    %v97 = vld [vmem:[#allocation6 + $0x10] sm:$0xff]
    %v98 = vld [vmem:[#allocation6 + $0x18] sm:$0xff]
    %v99 = vld [vmem:[#allocation6 + $0x20] sm:$0xff]
    %v100 = vld [vmem:[#allocation6 + $0x28] sm:$0xff]
    %v101 = vld [vmem:[#allocation6 + $0x30] sm:$0xff]
    %v102 = vld [vmem:[#allocation6 + $0x38] sm:$0xff]
    %v103 = vld [vmem:[#allocation6 + $0x40] sm:$0xff]
    %v104 = vld [vmem:[#allocation6 + $0x48] sm:$0xff]
    %v105 = vld [vmem:[#allocation6 + $0x50] sm:$0xff]
    %v106 = vld [vmem:[#allocation6 + $0x58] sm:$0xff]
    %v107 = vld [vmem:[#allocation6 + $0x60] sm:$0xff]
    %v108 = vld [vmem:[#allocation6 + $0x68] sm:$0xff]
    %v109 = vld [vmem:[#allocation6 + $0x70] sm:$0xff]
    %v110 = vld [vmem:[#allocation6 + $0x78] sm:$0xff]
    %111 = vmatprep.subr.mxu0 0.0
    %112 = vmatpush1.msra.mxu0 %v95
    %113 = vmatprep.subr.mxu0 0.0
    %114 = vmatpush1.msra.mxu0 %v96
    %115 = vmatprep.subr.mxu0 0.0
    %116 = vmatpush1.msra.mxu0 %v97
    %117 = vmatprep.subr.mxu0 0.0
    %118 = vmatpush1.msra.mxu0 %v98
    %119 = vmatprep.subr.mxu0 0.0
    %120 = vmatpush1.msra.mxu0 %v99
    %121 = vmatprep.subr.mxu0 0.0
    %122 = vmatpush1.msra.mxu0 %v100
    %123 = vmatprep.subr.mxu0 0.0
    %124 = vmatpush1.msra.mxu0 %v101
    %125 = vmatprep.subr.mxu0 0.0
    %126 = vmatpush1.msra.mxu0 %v102
    %127 = vmatprep.subr.mxu0 0.0
    %128 = vmatpush1.msra.mxu0 %v103
    %129 = vmatprep.subr.mxu0 0.0
    %130 = vmatpush1.msra.mxu0 %v104
    %131 = vmatprep.subr.mxu0 0.0
    %132 = vmatpush1.msra.mxu0 %v105
    %133 = vmatprep.subr.mxu0 0.0
    %134 = vmatpush1.msra.mxu0 %v106
    %135 = vmatprep.subr.mxu0 0.0
    %136 = vmatpush1.msra.mxu0 %v107
    %137 = vmatprep.subr.mxu0 0.0
    %138 = vmatpush1.msra.mxu0 %v108
    %139 = vmatprep.subr.mxu0 0.0
    %140 = vmatpush1.msra.mxu0 %v109
    %141 = vmatprep.subr.mxu0 0.0
    %142 = vmatpush1.msra.mxu0 %v110
    %143 = vmatprep.subr.mxu0 0.0
    %144 = vmatpush1.msra.mxu0 0.0
    %145 = vmatprep.subr.mxu0 0.0
    %146 = vmatpush1.msra.mxu0 0.0
    %147 = vmatprep.subr.mxu0 0.0
    %148 = vmatpush1.msra.mxu0 0.0
    %149 = vmatprep.subr.mxu0 0.0
    %150 = vmatpush1.msra.mxu0 0.0
    %151 = vmatprep.subr.mxu0 0.0
    %152 = vmatpush1.msra.mxu0 0.0
    %153 = vmatprep.subr.mxu0 0.0
    %154 = vmatpush1.msra.mxu0 0.0
    %155 = vmatprep.subr.mxu0 0.0
    %156 = vmatpush1.msra.mxu0 0.0
    %157 = vmatprep.subr.mxu0 0.0
    %158 = vmatpush1.msra.mxu0 0.0
    %159 = vmatprep.subr.mxu0 0.0
    %160 = vmatpush1.msra.mxu0 0.0
    %161 = vmatprep.subr.mxu0 0.0
    %162 = vmatpush1.msra.mxu0 0.0
    %163 = vmatprep.subr.mxu0 0.0
    %164 = vmatpush1.msra.mxu0 0.0
    %165 = vmatprep.subr.mxu0 0.0
    %166 = vmatpush1.msra.mxu0 0.0
    %167 = vmatprep.subr.mxu0 0.0
    %168 = vmatpush1.msra.mxu0 0.0
    %169 = vmatprep.subr.mxu0 0.0
    %170 = vmatpush1.msra.mxu0 0.0
    %171 = vmatprep.subr.mxu0 0.0
    %172 = vmatpush1.msra.mxu0 0.0
    %173 = vmatprep.subr.mxu0 0.0
    %174 = vmatpush1.msra.mxu0 0.0
    %175 = vmatprep.mubr.f32.mxu0 0.0
    %176 = vmatmul.mubr.f32.gmra.mrb[0].mxu0 %v79
    %v177 = vpop.f32.mrb[0].mxu0
    %v178 = vadd.f32 0.0, %v177
    %v179 = vpop.f32.mrb[0].mxu0
    %180 = vmatprep.mubr.f32.mxu0 0.0
    %181 = vmatmul.mubr.f32.gmra.mrb[0].mxu0 %v80
    %v182 = vpop.f32.mrb[0].mxu0
    %v183 = vadd.f32 0.0, %v182
    %v184 = vpop.f32.mrb[0].mxu0
    %185 = vmatprep.mubr.f32.mxu0 0.0
    %186 = vmatmul.mubr.f32.gmra.mrb[0].mxu0 %v81
    %v187 = vpop.f32.mrb[0].mxu0
    %v188 = vadd.f32 0.0, %v187
    %v189 = vpop.f32.mrb[0].mxu0
    %190 = vmatprep.mubr.f32.mxu0 0.0
    %191 = vmatmul.mubr.f32.gmra.mrb[0].mxu0 %v82
    %v192 = vpop.f32.mrb[0].mxu0
    %v193 = vadd.f32 0.0, %v192
    %v194 = vpop.f32.mrb[0].mxu0
    %195 = vmatprep.mubr.f32.mxu0 0.0
    %196 = vmatmul.mubr.f32.gmra.mrb[0].mxu0 %v83
    %v197 = vpop.f32.mrb[0].mxu0
    %v198 = vadd.f32 0.0, %v197
    %v199 = vpop.f32.mrb[0].mxu0
    %200 = vmatprep.mubr.f32.mxu0 0.0
    %201 = vmatmul.mubr.f32.gmra.mrb[0].mxu0 %v84
    %v202 = vpop.f32.mrb[0].mxu0
    %v203 = vadd.f32 0.0, %v202
    %v204 = vpop.f32.mrb[0].mxu0
    %205 = vmatprep.mubr.f32.mxu0 0.0
    %206 = vmatmul.mubr.f32.gmra.mrb[0].mxu0 %v85
    %v207 = vpop.f32.mrb[0].mxu0
    %v208 = vadd.f32 0.0, %v207
    %v209 = vpop.f32.mrb[0].mxu0
    %210 = vmatprep.mubr.f32.mxu0 0.0
    %211 = vmatmul.mubr.f32.gmra.mrb[0].mxu0 %v86
    %v212 = vpop.f32.mrb[0].mxu0
    %v213 = vadd.f32 0.0, %v212
    %v214 = vpop.f32.mrb[0].mxu0
    %215 = vmatprep.mubr.f32.mxu0 0.0
    %216 = vmatmul.mubr.f32.gmra.mrb[0].mxu0 %v87
    %v217 = vpop.f32.mrb[0].mxu0
    %v218 = vadd.f32 0.0, %v217
    %v219 = vpop.f32.mrb[0].mxu0
    %220 = vmatprep.mubr.f32.mxu0 0.0
    %221 = vmatmul.mubr.f32.gmra.mrb[0].mxu0 %v88
    %v222 = vpop.f32.mrb[0].mxu0
    %v223 = vadd.f32 0.0, %v222
    %v224 = vpop.f32.mrb[0].mxu0
    %225 = vmatprep.mubr.f32.mxu0 0.0
    %226 = vmatmul.mubr.f32.gmra.mrb[0].mxu0 %v89
    %v227 = vpop.f32.mrb[0].mxu0
    %v228 = vadd.f32 0.0, %v227
    %v229 = vpop.f32.mrb[0].mxu0
    %230 = vmatprep.mubr.f32.mxu0 0.0
    %231 = vmatmul.mubr.f32.gmra.mrb[0].mxu0 %v90
    %v232 = vpop.f32.mrb[0].mxu0
    %v233 = vadd.f32 0.0, %v232
    %v234 = vpop.f32.mrb[0].mxu0
    %235 = vmatprep.mubr.f32.mxu0 0.0
    %236 = vmatmul.mubr.f32.gmra.mrb[0].mxu0 %v91
    %v237 = vpop.f32.mrb[0].mxu0
    %v238 = vadd.f32 0.0, %v237
    %v239 = vpop.f32.mrb[0].mxu0
    %240 = vmatprep.mubr.f32.mxu0 0.0
    %241 = vmatmul.mubr.f32.gmra.mrb[0].mxu0 %v92
    %v242 = vpop.f32.mrb[0].mxu0
    %v243 = vadd.f32 0.0, %v242
    %v244 = vpop.f32.mrb[0].mxu0
    %245 = vmatprep.mubr.f32.mxu0 0.0
    %246 = vmatmul.mubr.f32.gmra.mrb[0].mxu0 %v93
    %v247 = vpop.f32.mrb[0].mxu0
    %v248 = vadd.f32 0.0, %v247
    %v249 = vpop.f32.mrb[0].mxu0
    %250 = vmatprep.mubr.f32.mxu0 0.0
    %251 = vmatmul.mubr.f32.gmra.mrb[0].mxu0 %v94
    %v252 = vpop.f32.mrb[0].mxu0
    %v253 = vadd.f32 0.0, %v252
    %v254 = vpop.f32.mrb[0].mxu0
    %255 = vdwg.mxu0
    %v256 = vadd.f32 %v63, %v178
    %v257 = vadd.f32 %v64, %v183
    %v258 = vadd.f32 %v65, %v188
    %v259 = vadd.f32 %v66, %v193
    %v260 = vadd.f32 %v67, %v198
    %v261 = vadd.f32 %v68, %v203
    %v262 = vadd.f32 %v69, %v208
    %v263 = vadd.f32 %v70, %v213
    %v264 = vadd.f32 %v71, %v218
    %v265 = vadd.f32 %v72, %v223
    %v266 = vadd.f32 %v73, %v228
    %v267 = vadd.f32 %v74, %v233
    %v268 = vadd.f32 %v75, %v238
    %v269 = vadd.f32 %v76, %v243
    %v270 = vadd.f32 %v77, %v248
    %v271 = vadd.f32 %v78, %v253
    %272 = vst [vmem:[#allocation2] sm:$0xff] %v256
    %273 = vst [vmem:[#allocation2 + $0x8] sm:$0xff] %v257
    %274 = vst [vmem:[#allocation2 + $0x10] sm:$0xff] %v258
    %275 = vst [vmem:[#allocation2 + $0x18] sm:$0xff] %v259
    %276 = vst [vmem:[#allocation2 + $0x20] sm:$0xff] %v260
    %277 = vst [vmem:[#allocation2 + $0x28] sm:$0xff] %v261
    %278 = vst [vmem:[#allocation2 + $0x30] sm:$0xff] %v262
    %279 = vst [vmem:[#allocation2 + $0x38] sm:$0xff] %v263
    %280 = vst [vmem:[#allocation2 + $0x40] sm:$0xff] %v264
    %281 = vst [vmem:[#allocation2 + $0x48] sm:$0xff] %v265
    %282 = vst [vmem:[#allocation2 + $0x50] sm:$0xff] %v266
    %283 = vst [vmem:[#allocation2 + $0x58] sm:$0xff] %v267
    %284 = vst [vmem:[#allocation2 + $0x60] sm:$0xff] %v268
    %285 = vst [vmem:[#allocation2 + $0x68] sm:$0xff] %v269
    %286 = vst [vmem:[#allocation2 + $0x70] sm:$0xff] %v270
    %287 = vst [vmem:[#allocation2 + $0x78] sm:$0xff] %v271
    // Predicated region
    $region26: #{tpu_custom_call.1} parent=1 // pred_check
      %p288 = pneg %p43
    $region27: #{tpu_custom_call.1} parent=1 // pred_check_branch
      %290 = sbr.rel (%p288) target = $region29
    $region28: #{tpu_custom_call.1} parent=1 // pred_region
      %v291 = vld [vmem:[#allocation2] sm:$0xff]
      %v292 = vld [vmem:[#allocation2 + $0x8] sm:$0xff]
      %v293 = vld [vmem:[#allocation2 + $0x10] sm:$0xff]
      %v294 = vld [vmem:[#allocation2 + $0x18] sm:$0xff]
      %v295 = vld [vmem:[#allocation2 + $0x20] sm:$0xff]
      %v296 = vld [vmem:[#allocation2 + $0x28] sm:$0xff]
      %v297 = vld [vmem:[#allocation2 + $0x30] sm:$0xff]
      %v298 = vld [vmem:[#allocation2 + $0x38] sm:$0xff]
      %v299 = vld [vmem:[#allocation2 + $0x40] sm:$0xff]
      %v300 = vld [vmem:[#allocation2 + $0x48] sm:$0xff]
      %v301 = vld [vmem:[#allocation2 + $0x50] sm:$0xff]
      %v302 = vld [vmem:[#allocation2 + $0x58] sm:$0xff]
      %v303 = vld [vmem:[#allocation2 + $0x60] sm:$0xff]
      %v304 = vld [vmem:[#allocation2 + $0x68] sm:$0xff]
      %v305 = vld [vmem:[#allocation2 + $0x70] sm:$0xff]
      %v306 = vld [vmem:[#allocation2 + $0x78] sm:$0xff]
      %v307 = vld [vmem:[%s2] sm:$0x1]
      %v309 = vlaneseq
      %v310 = vshrl.u32 %v309, 7
      %v311 = vsub.s32 0, %v310
      %v312 = vrot.slane %v307, %v311
      %v314 = vadd.f32 %v291, %v312
      %v315 = vadd.f32 %v292, %v312
      %v316 = vadd.f32 %v293, %v312
      %v317 = vadd.f32 %v294, %v312
      %v318 = vadd.f32 %v295, %v312
      %v319 = vadd.f32 %v296, %v312
      %v320 = vadd.f32 %v297, %v312
      %v321 = vadd.f32 %v298, %v312
      %v322 = vadd.f32 %v299, %v312
      %v323 = vadd.f32 %v300, %v312
      %v324 = vadd.f32 %v301, %v312
      %v325 = vadd.f32 %v302, %v312
      %v326 = vadd.f32 %v303, %v312
      %v327 = vadd.f32 %v304, %v312
      %v328 = vadd.f32 %v305, %v312
      %v329 = vadd.f32 %v306, %v312
      %v330 = vmax.f32 %v314, 0.0
      %v331 = vmax.f32 %v315, 0.0
      %v332 = vmax.f32 %v316, 0.0
      %v333 = vmax.f32 %v317, 0.0
      %v334 = vmax.f32 %v318, 0.0
      %v335 = vmax.f32 %v319, 0.0
      %v336 = vmax.f32 %v320, 0.0
      %v337 = vmax.f32 %v321, 0.0
      %v338 = vmax.f32 %v322, 0.0
      %v339 = vmax.f32 %v323, 0.0
      %v340 = vmax.f32 %v324, 0.0
      %v341 = vmax.f32 %v325, 0.0
      %v342 = vmax.f32 %v326, 0.0
      %v343 = vmax.f32 %v327, 0.0
      %v344 = vmax.f32 %v328, 0.0
      %v345 = vmax.f32 %v329, 0.0
      %346 = vst [vmem:[#allocation8] sm:$0xff] %v330
      %347 = vst [vmem:[#allocation8 + $0x8] sm:$0xff] %v331
      %348 = vst [vmem:[#allocation8 + $0x10] sm:$0xff] %v332
      %349 = vst [vmem:[#allocation8 + $0x18] sm:$0xff] %v333
      %350 = vst [vmem:[#allocation8 + $0x20] sm:$0xff] %v334
      %351 = vst [vmem:[#allocation8 + $0x28] sm:$0xff] %v335
      %352 = vst [vmem:[#allocation8 + $0x30] sm:$0xff] %v336
      %353 = vst [vmem:[#allocation8 + $0x38] sm:$0xff] %v337
      %354 = vst [vmem:[#allocation8 + $0x40] sm:$0xff] %v338
      %355 = vst [vmem:[#allocation8 + $0x48] sm:$0xff] %v339
      %356 = vst [vmem:[#allocation8 + $0x50] sm:$0xff] %v340
      %357 = vst [vmem:[#allocation8 + $0x58] sm:$0xff] %v341
      %358 = vst [vmem:[#allocation8 + $0x60] sm:$0xff] %v342
      %359 = vst [vmem:[#allocation8 + $0x68] sm:$0xff] %v343
      %360 = vst [vmem:[#allocation8 + $0x70] sm:$0xff] %v344
      %361 = vst [vmem:[#allocation8 + $0x78] sm:$0xff] %v345
    $region29: #{tpu_custom_call.1} parent=1 // pred_fallthru
      _
    // Predicated region
    $region30: #{tpu_custom_call.1} parent=1 // pred_check
      _
    $region31: #{tpu_custom_call.1} parent=1 // pred_check_branch
      %363 = sbr.rel (0) target = $region33
    $region32: #{tpu_custom_call.1} parent=1 // pred_region
      %s365 = ssub.s32 2048, 2048
      %366 = vsyncadd [#allocation5], %s365
      %s367 = sshll.u32 [#allocation8], 4
      %s368 = int_to_ptr.vmem [resolvable:$true] %s367
      %373 = dma.vmem_to_hbm [thread:$0]  %s368, 2048, %s3, [#allocation5], 128, 128, 8
    $region33: #{tpu_custom_call.1} parent=1 // pred_fallthru
      _
    // Predicated region
    $region34: #{tpu_custom_call.1} parent=1 // pred_check
      _
    $region35: #{tpu_custom_call.1} parent=1 // pred_check_branch
      %375 = sbr.rel (0) target = $region37
    $region36: #{tpu_custom_call.1} parent=1 // pred_region
      %376 = dma.done [#allocation5], 2048
    $region37: #{tpu_custom_call.1} parent=1 // pred_fallthru
      _
    %377 = vsyncpa [#allocation4], 1
    %378 = vsyncpa [#allocation7], 1
    %379 = vsyncpa [#allocation5], 1

</llo_original>
